<compile_context>
chip_gen: v7x
topology: tpu7x:2x2x1
jax: 0.10.0
libtpu: 0.0.40
codegen_flags: <defaults>
</compile_context>

<pallas_src>
import functools

import jax
import jax.numpy as jnp
import numpy as np
from jax.experimental import pallas as pl
from jax.experimental.pallas import tpu as pltpu


# ----------------------------------------------------------------------------
# Pallas kernel: fused ResBlock on one (batch, pooled-time tile) block
# ----------------------------------------------------------------------------
def _resblock_kernel(x_ref, w1_ref, b1_ref, w2_ref, b2_ref, prelu_ref,
                     o_ref, y_scr, *, downsample, cout, tl):
    """
    x_ref:    (1, 3*tl, Cin)    contiguous channels-last input rows (3 per pooled row)
    w1_ref:   (Cin, Nw)  bf16   conv1 (BN1 folded) [| conv_downsample] packed on N
    b1_ref:   (1, Cout)  f32    BN1 shift
    w2_ref:   (Cout, Cout) bf16 conv2 (BN2 folded)
    b2_ref:   (1, Cout)  f32    BN2 shift
    prelu_ref:(2,)       f32    SMEM [alpha1, alpha2]
    o_ref:    (1, tl, Cout) f32 pooled output
    y_scr:    (3*tl, Cout) f32  VMEM scratch holding the pre-pool activations
    """
    a1 = prelu_ref[0]
    a2 = prelu_ref[1]

    x = x_ref[0]                                        # (3*tl, Cin)
    xb = x.astype(w1_ref.dtype)                         # bf16 for the MXU

    # conv1 (+ packed downsample conv): ONE merged MXU matmul over 3*tl rows.
    z = jnp.dot(xb, w1_ref[...], preferred_element_type=jnp.float32)
    if downsample:
        h = z[:, :cout] + b1_ref[...]
        res = z[:, cout:]
    else:
        h = z + b1_ref[...]
        res = x.astype(jnp.float32)
    h = jnp.where(h >= 0, h, a1 * h)                    # PReLU1 (f32)

    h2 = jnp.dot(h.astype(w2_ref.dtype), w2_ref[...],   # conv2 + BN2
                 preferred_element_type=jnp.float32) + b2_ref[...]
    y = h2 + res                                        # residual add
    y = jnp.where(y >= 0, y, a2 * y)                    # PReLU2 (f32)

    # MaxPool1d(kernel=3, stride=3): de-interleave the three phases with
    # strided sublane reads from VMEM scratch (no HBM round-trip) and max.
    y_scr[...] = y
    p = jnp.maximum(y_scr[pl.ds(0, tl, stride=3), :],
                    y_scr[pl.ds(1, tl, stride=3), :])
    p = jnp.maximum(p, y_scr[pl.ds(2, tl, stride=3), :])
    o_ref[0] = p.astype(o_ref.dtype)


# ----------------------------------------------------------------------------
# Tile selection (VMEM-budget aware, v7x-safe, >=2 parallel blocks when B == 1)
# ----------------------------------------------------------------------------
def _round_up(n, m):
    return ((n + m - 1) // m) * m


def _choose_time_tile(lout, cin, nw, cout, x_bytes, batch,
                      max_time_tile, vmem_budget):
    # Bytes per pooled-output row held in VMEM:
    per_row = (2 * 3 * cin * x_bytes        # double-buffered input block (3 rows / pooled row)
               + 2 * cout * 4               # double-buffered output block
               + 3 * cout * 4               # pooling scratch
               + 3 * (nw + 2 * cout) * 4)   # f32 in-kernel temporaries (z, h, y)
    # Fixed cost: (double-buffered) bf16 weights, biases, slack.
    fixed = 2 * 2 * (cin * nw + cout * cout) + 8 * cout + (256 << 10)
    cap = max((vmem_budget - fixed) // per_row, 8)

    tl = min(int(max_time_tile), int(cap), _round_up(lout, 8))
    tl = max(8, (tl // 8) * 8)
    if batch == 1 and lout > 8:
        # v7x has 2 TensorCores: make sure the parallel grid has >= 2 blocks.
        tl = min(tl, _round_up((lout + 1) // 2, 8))
    return tl


# ----------------------------------------------------------------------------
# Core wrapper: channels-last (B, L, Cin) -> (B, Lout, Cout), zero transposes.
# ----------------------------------------------------------------------------
def resblock_convtasnet_nlc(x, params, *, max_time_tile=512,
                            vmem_budget_bytes=40 * 1024 * 1024,
                            matmul_dtype=jnp.bfloat16, eps=1e-5):
    B, L, Cin = x.shape
    if L < 3:
        raise ValueError("MaxPool1d(3) requires L >= 3")
    w1 = params["conv1_w"]                  # (Cout, Cin)
    w2 = params["conv2_w"]                  # (Cout, Cout)
    Cout = w1.shape[0]
    downsample = Cin != Cout

    # Fold eval-mode BatchNorm into the bias-free 1x1 convs (exact).
    s1 = params["bn1_gamma"] / jnp.sqrt(params["bn1_var"] + eps)
    s2 = params["bn2_gamma"] / jnp.sqrt(params["bn2_var"] + eps)
    b1 = (params["bn1_beta"] - params["bn1_mean"] * s1).reshape(1, Cout).astype(jnp.float32)
    b2 = (params["bn2_beta"] - params["bn2_mean"] * s2).reshape(1, Cout).astype(jnp.float32)
    w1f = (w1 * s1[:, None]).T              # (Cin, Cout)
    w2f = (w2 * s2[:, None]).T              # (Cout, Cout)
    if downsample:
        # Pack conv1 and conv_downsample so the big matmul has N = 2*Cout.
        w1f = jnp.concatenate([w1f, params["conv_downsample_w"].T], axis=1)
    w1f = w1f.astype(matmul_dtype)
    w2f = w2f.astype(matmul_dtype)
    Nw = w1f.shape[1]
    prelu = jnp.stack([params["prelu1_a"], params["prelu2_a"]]).astype(jnp.float32)

    Lout = (L - 3) // 3 + 1
    Tl = _choose_time_tile(Lout, Cin, Nw, Cout,
                           x_bytes=jnp.dtype(x.dtype).itemsize, batch=B,
                           max_time_tile=max_time_tile,
                           vmem_budget=vmem_budget_bytes)
    Lout_pad = _round_up(Lout, Tl)
    need = 3 * Lout_pad
    if L < need:
        # Pad the time axis so every input block is in-bounds; padded rows only
        # influence pooled rows >= Lout, which are sliced off below.
        x = jnp.pad(x, ((0, 0), (0, need - L), (0, 0)))
    grid = (B, Lout_pad // Tl)

    kernel = functools.partial(_resblock_kernel,
                               downsample=downsample, cout=Cout, tl=Tl)

    out = pl.pallas_call(
        kernel,
        out_shape=jax.ShapeDtypeStruct((B, Lout_pad, Cout), jnp.float32),
        grid=grid,
        in_specs=[
            pl.BlockSpec((1, 3 * Tl, Cin), lambda b, t: (b, t, 0)),
            pl.BlockSpec((Cin, Nw), lambda b, t: (0, 0)),
            pl.BlockSpec((1, Cout), lambda b, t: (0, 0)),
            pl.BlockSpec((Cout, Cout), lambda b, t: (0, 0)),
            pl.BlockSpec((1, Cout), lambda b, t: (0, 0)),
            pl.BlockSpec(memory_space=pltpu.MemorySpace.SMEM),
        ],
        out_specs=pl.BlockSpec((1, Tl, Cout), lambda b, t: (b, t, 0)),
        scratch_shapes=[pltpu.VMEM((3 * Tl, Cout), jnp.float32)],
        compiler_params=pltpu.CompilerParams(
            dimension_semantics=("parallel", "parallel"),
            vmem_limit_bytes=int(vmem_budget_bytes) + (8 << 20)),
    )(x, w1f, b1, w2f, b2, prelu)

    if Lout_pad != Lout:
        out = out[:, :Lout, :]
    return out


# ----------------------------------------------------------------------------
# PyTorch-layout convenience wrapper: NCL in, NCL out (drop-in for the module).
# ----------------------------------------------------------------------------
def resblock_convtasnet(x, params, **kwargs):
    """x: (B, in_dims, L) -> (B, out_dims, (L-3)//3 + 1), PyTorch NCL layout."""
    # The two transposes below are the only remaining host-side HBM passes;
    # channels-last pipelines should call resblock_convtasnet_nlc directly.
    # The bf16 downcast fuses into the transpose, halving what the kernel reads.
    x_nlc = jnp.transpose(x, (0, 2, 1)).astype(jnp.bfloat16)
    y_nlc = resblock_convtasnet_nlc(x_nlc, params, **kwargs)
    return jnp.transpose(y_nlc, (0, 2, 1))


# ----------------------------------------------------------------------------
# Deterministic parameter init (shapes as nn.Conv1d / nn.BatchNorm1d / nn.PReLU)
# ----------------------------------------------------------------------------
def init_params(key, in_dims, out_dims):
    ks = jax.random.split(key, 11)

    def u(k, shape, s):
        return jax.random.uniform(k, shape, jnp.float32, -s, s)

    k1 = 1.0 / np.sqrt(in_dims)
    k2 = 1.0 / np.sqrt(out_dims)
    p = {
        "conv1_w": u(ks[0], (out_dims, in_dims), k1),
        "conv2_w": u(ks[1], (out_dims, out_dims), k2),
        "bn1_gamma": jax.random.uniform(ks[2], (out_dims,), jnp.float32, 0.5, 1.5),
        "bn1_beta": u(ks[3], (out_dims,), 0.5),
        "bn1_mean": u(ks[4], (out_dims,), 0.5),
        "bn1_var": jax.random.uniform(ks[5], (out_dims,), jnp.float32, 0.5, 1.5),
        "bn2_gamma": jax.random.uniform(ks[6], (out_dims,), jnp.float32, 0.5, 1.5),
        "bn2_beta": u(ks[7], (out_dims,), 0.5),
        "bn2_mean": u(ks[8], (out_dims,), 0.5),
        "bn2_var": jax.random.uniform(ks[9], (out_dims,), jnp.float32, 0.5, 1.5),
        "prelu1_a": jnp.float32(0.25),
        "prelu2_a": jnp.float32(0.1),
    }
    if in_dims != out_dims:
        p["conv_downsample_w"] = u(ks[10], (out_dims, in_dims), k1)
    return p


# ----------------------------------------------------------------------------
# Pure-numpy float64 reference (eval-mode BN), for the correctness check
# ----------------------------------------------------------------------------
def ref_forward(x, p, eps=1e-5):
    x = np.asarray(x, np.float64)

    def conv1x1(w, z):
        return np.einsum("oc,bcl->bol", np.asarray(w, np.float64), z)

    def bn(z, g, b, m, v):
        g, b, m, v = [np.asarray(t, np.float64)[None, :, None] for t in (g, b, m, v)]
        return g * (z - m) / np.sqrt(v + eps) + b

    def prelu(z, a):
        a = float(a)
        return np.where(z >= 0, z, a * z)

    h = prelu(bn(conv1x1(p["conv1_w"], x), p["bn1_gamma"], p["bn1_beta"],
                 p["bn1_mean"], p["bn1_var"]), p["prelu1_a"])
    h = bn(conv1x1(p["conv2_w"], h), p["bn2_gamma"], p["bn2_beta"],
           p["bn2_mean"], p["bn2_var"])
    res = conv1x1(p["conv_downsample_w"], x) if "conv_downsample_w" in p else x
    y = prelu(h + res, p["prelu2_a"])
    B, C, L = y.shape
    l_out = (L - 3) // 3 + 1
    return y[:, :, :3 * l_out].reshape(B, C, l_out, 3).max(-1)


# ----------------------------------------------------------------------------
if __name__ == "__main__":
    configs = [
        # (B, in_dims, out_dims, L, max_time_tile)
        (2, 16, 32, 48, 512),     # downsample path (in_dims != out_dims)
        (2, 32, 32, 45, 512),     # identity residual, L not a multiple of 3 (padded tail)
        (2, 16, 32, 96, 8),       # multi-tile grid along the pooled-time axis
        (1, 16, 32, 96, 512),     # B == 1 -> tile split so >=2 parallel blocks (v7x 2-TC)
        (2, 128, 128, 384, 512),  # 128-channel config: lane-aligned weights/outputs
    ]
    key = jax.random.PRNGKey(0)
    for (B, cin, cout, L, tl_cap) in configs:
        key, kx, kp = jax.random.split(key, 3)
        x = jax.random.normal(kx, (B, cin, L), jnp.float32)
        params = init_params(kp, cin, cout)

        out = resblock_convtasnet(x, params, max_time_tile=tl_cap)
        out = jax.block_until_ready(out)

        l_out = (L - 3) // 3 + 1
        assert out.shape == (B, cout, l_out), out.shape

        # The kernel quantizes activations/weights to bf16 for the MXU (f32
        # accumulation); compare against a f64 reference on the bf16-quantized
        # input with a tolerance sized for bf16 weight rounding.
        x_q = np.asarray(jnp.asarray(x).astype(jnp.bfloat16).astype(jnp.float32))
        ref = ref_forward(x_q, {k: np.asarray(v) for k, v in params.items()})
        np.testing.assert_allclose(np.asarray(out, np.float64), ref,
                                   rtol=3e-2, atol=3e-2)

    print("KERNEL_OK")
</pallas_src>

<mosaic_0001>
module attributes {stable_mosaic.version = 11 : i64} {
  func.func @_resblock_kernel(%arg0: i32, %arg1: i32, %arg2: memref<1x48x16xbf16, #tpu.memory_space<vmem>>, %arg3: memref<16x64xbf16, #tpu.memory_space<vmem>>, %arg4: memref<1x32xf32, #tpu.memory_space<vmem>>, %arg5: memref<32x32xbf16, #tpu.memory_space<vmem>>, %arg6: memref<1x32xf32, #tpu.memory_space<vmem>>, %arg7: memref<2xf32, #tpu.memory_space<smem>>, %arg8: memref<1x16x32xf32, #tpu.memory_space<vmem>>, %arg9: memref<48x32xf32, #tpu.memory_space<vmem>>) attributes {dimension_semantics = [#tpu.dimension_semantics<parallel>, #tpu.dimension_semantics<parallel>], iteration_bounds = array<i64: 2, 1>, scalar_prefetch = 0 : i64, scratch_operands = 1 : i64, tpu.core_type = #tpu.core_type<tc>, window_params = [{transform_indices = @transform_0, window_bounds = array<i64: 1, 48, 16>}, {pipeline_mode = #tpu.pipeline_mode<synchronous>, transform_indices = @transform_1, window_bounds = array<i64: 16, 64>}, {pipeline_mode = #tpu.pipeline_mode<synchronous>, transform_indices = @transform_2, window_bounds = array<i64: 1, 32>}, {pipeline_mode = #tpu.pipeline_mode<synchronous>, transform_indices = @transform_3, window_bounds = array<i64: 32, 32>}, {pipeline_mode = #tpu.pipeline_mode<synchronous>, transform_indices = @transform_4, window_bounds = array<i64: 1, 32>}, {transform_indices = @transform_5, window_bounds = array<i64: 2>}, {transform_indices = @transform_6, window_bounds = array<i64: 1, 16, 32>}]} {
    %c0 = arith.constant 0 : index
    %0 = memref.load %arg7[%c0] : memref<2xf32, #tpu.memory_space<smem>>
    %c1 = arith.constant 1 : index
    %1 = memref.load %arg7[%c1] : memref<2xf32, #tpu.memory_space<smem>>
    %c0_0 = arith.constant 0 : index
    %c0_1 = arith.constant 0 : index
    %c0_2 = arith.constant 0 : index
    %2 = vector.load %arg2[%c0_0, %c0_1, %c0_2] : memref<1x48x16xbf16, #tpu.memory_space<vmem>>, vector<1x48x16xbf16>
    %3 = vector.shape_cast %2 : vector<1x48x16xbf16> to vector<48x16xbf16>
    %c0_3 = arith.constant 0 : index
    %c0_4 = arith.constant 0 : index
    %4 = vector.load %arg3[%c0_3, %c0_4] : memref<16x64xbf16, #tpu.memory_space<vmem>>, vector<16x64xbf16>
    %cst = arith.constant dense<0.000000e+00> : vector<48x64xf32>
    %5 = tpu.matmul %3, %4, %cst {dimension_numbers = #tpu.dot_dimension_numbers<[1], [0], [0], [1], [0, 0, 1, 1], [], []>} : vector<48x16xbf16>, vector<16x64xbf16>, vector<48x64xf32> -> vector<48x64xf32>
    %6 = vector.extract_strided_slice %5 {offsets = [0, 0], sizes = [48, 32], strides = [1, 1]} : vector<48x64xf32> to vector<48x32xf32>
    %c0_5 = arith.constant 0 : index
    %c0_6 = arith.constant 0 : index
    %7 = vector.load %arg4[%c0_5, %c0_6] : memref<1x32xf32, #tpu.memory_space<vmem>>, vector<1x32xf32>
    %8 = vector.broadcast %7 : vector<1x32xf32> to vector<48x32xf32>
    %9 = arith.addf %6, %8 : vector<48x32xf32>
    %10 = vector.extract_strided_slice %5 {offsets = [0, 32], sizes = [48, 32], strides = [1, 1]} : vector<48x64xf32> to vector<48x32xf32>
    %cst_7 = arith.constant 0.000000e+00 : f32
    %11 = vector.broadcast %cst_7 : f32 to vector<48x32xf32>
    %12 = arith.cmpf oge, %9, %11 : vector<48x32xf32>
    %13 = vector.broadcast %0 : f32 to vector<48x32xf32>
    %14 = arith.mulf %13, %9 : vector<48x32xf32>
    %15 = arith.select %12, %9, %14 : vector<48x32xi1>, vector<48x32xf32>
    %16 = arith.truncf %15 : vector<48x32xf32> to vector<48x32xbf16>
    %c0_8 = arith.constant 0 : index
    %c0_9 = arith.constant 0 : index
    %17 = vector.load %arg5[%c0_8, %c0_9] : memref<32x32xbf16, #tpu.memory_space<vmem>>, vector<32x32xbf16>
    %cst_10 = arith.constant dense<0.000000e+00> : vector<48x32xf32>
    %18 = tpu.matmul %16, %17, %cst_10 {dimension_numbers = #tpu.dot_dimension_numbers<[1], [0], [0], [1], [0, 0, 1, 1], [], []>} : vector<48x32xbf16>, vector<32x32xbf16>, vector<48x32xf32> -> vector<48x32xf32>
    %c0_11 = arith.constant 0 : index
    %c0_12 = arith.constant 0 : index
    %19 = vector.load %arg6[%c0_11, %c0_12] : memref<1x32xf32, #tpu.memory_space<vmem>>, vector<1x32xf32>
    %20 = vector.broadcast %19 : vector<1x32xf32> to vector<48x32xf32>
    %21 = arith.addf %18, %20 : vector<48x32xf32>
    %22 = arith.addf %21, %10 : vector<48x32xf32>
    %cst_13 = arith.constant 0.000000e+00 : f32
    %23 = vector.broadcast %cst_13 : f32 to vector<48x32xf32>
    %24 = arith.cmpf oge, %22, %23 : vector<48x32xf32>
    %25 = vector.broadcast %1 : f32 to vector<48x32xf32>
    %26 = arith.mulf %25, %22 : vector<48x32xf32>
    %27 = arith.select %24, %22, %26 : vector<48x32xi1>, vector<48x32xf32>
    %c0_14 = arith.constant 0 : index
    %c0_15 = arith.constant 0 : index
    %28 = vector.load %arg9[%c0_14, %c0_15] : memref<48x32xf32, #tpu.memory_space<vmem>>, vector<48x32xf32>
    tpu.vector_store %arg9[%c0_14, %c0_15], %27 {strides = array<i32>} : memref<48x32xf32, #tpu.memory_space<vmem>>, vector<48x32xf32>,
    %c0_16 = arith.constant 0 : index
    %c0_17 = arith.constant 0 : index
    %29 = tpu.strided_load %arg9[%c0_16, %c0_17] {strides = array<i32: 3, 1>} : memref<48x32xf32, #tpu.memory_space<vmem>>, vector<16x32xf32>
    %c1_18 = arith.constant 1 : index
    %c0_19 = arith.constant 0 : index
    %30 = tpu.strided_load %arg9[%c1_18, %c0_19] {strides = array<i32: 3, 1>} : memref<48x32xf32, #tpu.memory_space<vmem>>, vector<16x32xf32>
    %31 = arith.maximumf %29, %30 : vector<16x32xf32>
    %c2 = arith.constant 2 : index
    %c0_20 = arith.constant 0 : index
    %32 = tpu.strided_load %arg9[%c2, %c0_20] {strides = array<i32: 3, 1>} : memref<48x32xf32, #tpu.memory_space<vmem>>, vector<16x32xf32>
    %33 = arith.maximumf %31, %32 : vector<16x32xf32>
    %c0_21 = arith.constant 0 : index
    %c0_22 = arith.constant 0 : index
    %c0_23 = arith.constant 0 : index
    %34 = vector.load %arg8[%c0_21, %c0_22, %c0_23] : memref<1x16x32xf32, #tpu.memory_space<vmem>>, vector<1x16x32xf32>
    %35 = vector.shape_cast %34 : vector<1x16x32xf32> to vector<16x32xf32>
    %36 = vector.shape_cast %33 : vector<16x32xf32> to vector<1x16x32xf32>
    tpu.vector_store %arg8[%c0_21, %c0_22, %c0_23], %36 {strides = array<i32>} : memref<1x16x32xf32, #tpu.memory_space<vmem>>, vector<1x16x32xf32>,
    return
  }
  func.func @transform_0(%arg0: i32, %arg1: i32) -> (i32, i32, i32) {
    %c0_i32 = arith.constant 0 : i32
    %c0_i32_0 = arith.constant 0 : i32
    return %arg0, %arg1, %c0_i32 : i32, i32, i32
  }
  func.func @transform_1(%arg0: i32, %arg1: i32) -> (i32, i32) {
    %c0_i32 = arith.constant 0 : i32
    %c0_i32_0 = arith.constant 0 : i32
    %c0_i32_1 = arith.constant 0 : i32
    return %c0_i32, %c0_i32_0 : i32, i32
  }
  func.func @transform_2(%arg0: i32, %arg1: i32) -> (i32, i32) {
    %c0_i32 = arith.constant 0 : i32
    %c0_i32_0 = arith.constant 0 : i32
    %c0_i32_1 = arith.constant 0 : i32
    return %c0_i32, %c0_i32_0 : i32, i32
  }
  func.func @transform_3(%arg0: i32, %arg1: i32) -> (i32, i32) {
    %c0_i32 = arith.constant 0 : i32
    %c0_i32_0 = arith.constant 0 : i32
    %c0_i32_1 = arith.constant 0 : i32
    return %c0_i32, %c0_i32_0 : i32, i32
  }
  func.func @transform_4(%arg0: i32, %arg1: i32) -> (i32, i32) {
    %c0_i32 = arith.constant 0 : i32
    %c0_i32_0 = arith.constant 0 : i32
    %c0_i32_1 = arith.constant 0 : i32
    return %c0_i32, %c0_i32_0 : i32, i32
  }
  func.func @transform_5(%arg0: i32, %arg1: i32) -> i32 {
    %c0_i32 = arith.constant 0 : i32
    %c0_i32_0 = arith.constant 0 : i32
    return %c0_i32 : i32
  }
  func.func @transform_6(%arg0: i32, %arg1: i32) -> (i32, i32, i32) {
    %c0_i32 = arith.constant 0 : i32
    %c0_i32_0 = arith.constant 0 : i32
    return %arg0, %arg1, %c0_i32 : i32, i32, i32
  }
}

</mosaic_0001>

<llo_original>
// kernel: tpu_custom_call.1
$region0: #{tpu_custom_call.1}
  #allocation0 [shape = 'u32[]', space=smem, size = 0x4, offset = 0x4, fixed_abs, tag = 'smem constant byte address 0x4 - core index']
  #allocation1 [shape = 'u32[144,128]{1,0:T(1,128)}', space=vmem, size = 0x12000, scoped, tag = 'internal scratch']
  #allocation2 [shape = 'f32[48,32]{1,0:T(8,128)}', space=vmem, size = 0x6000, scoped, tag = 'scratch operand']
  %s0 = inlined_call_operand.vmem [shape: bf16[2,48,16], index: 0, kind: input, shape index: {}]
  %s1 = inlined_call_operand.vmem [shape: bf16[16,64], index: 1, kind: input, shape index: {}]
  %s2 = inlined_call_operand.vmem [shape: f32[1,32], index: 2, kind: input, shape index: {}]
  %s3 = inlined_call_operand.vmem [shape: bf16[32,32], index: 3, kind: input, shape index: {}]
  %s4 = inlined_call_operand.vmem [shape: f32[1,32], index: 4, kind: input, shape index: {}]
  %s5 = inlined_call_operand.vmem [shape: f32[2], index: 5, kind: input, shape index: {}]
  %s6 = inlined_call_operand.hbm [shape: f32[2,16,32], index: 6, kind: output, shape index: {}]
  %s7 = sld [smem:[#allocation0]]
  $region61: #{tpu_custom_call.1} parent=0
    _
  %s9 = ssub.s32 1, %s7
  %s10 = scalar_select 0, %s9, %s7
  $region1: #{tpu_custom_call.1} parent=0
    #allocation3 [shape = 'u8[512]{0}', space=smem, size = 0x200, scoped, tag = 'input window, operand 5, single buffered']
    #allocation4 [shape = 's32[2]{0}', space=sflag, size = 0x8, scoped, tag = 'scoped memory for tpu_custom_call.1']
    #allocation5 [shape = 's32[2]{0}', space=sflag, size = 0x8, scoped, tag = 'scoped memory for tpu_custom_call.1']
    #allocation6 [shape = 'u8[16384]{0}', space=vmem, size = 0x4000, scoped, tag = 'output window, operand 0']
    %11 = vsyncpa [#allocation5], 0
    %12 = vsyncpa [#allocation4], 0
    %s13 = scalar_lea.sflag [#allocation4], 1
    %14 = vsyncpa %s13, 0
    loop: start=0, step=1, limit=4
    $region2: #{tpu_custom_call.1} parent=1 // loop_pre_header
      _
    $region3: #{tpu_custom_call.1} parent=1 // loop_header
      %s16 = sphi 0, %s20
      %p17 = scmp.ge.s32.totalorder %s16, 4
      %s23 = sphi 0, %s35
      %s24 = sphi 0, %s31
      %s25 = sphi 0, %s23
      %s26 = sphi 0, %s24
      %s27 = sphi 0, %s25
      %s28 = sphi 0, %s26
      %s40 = sphi 0, %s42
      %s43 = sphi 0, %s40
      %s44 = sphi 0, %s43
      %s60 = sphi 0, %s44
      %s64 = sphi 0, %s64
      %s66 = sphi 0, %s64
      %s67 = sphi 0, %s66
      %s81 = sphi 0, %s67
      %s85 = sphi 0, %s85
      %s87 = sphi 0, %s85
      %s88 = sphi 0, %s87
      %s102 = sphi 0, %s88
      %s106 = sphi 0, %s106
      %s108 = sphi 0, %s106
      %s109 = sphi 0, %s108
      %s123 = sphi 0, %s109
      %s127 = sphi 0, %s127
      %s129 = sphi 0, %s127
      %s130 = sphi 0, %s129
      %s144 = sphi 0, %s130
      %s148 = sphi 0, %s148
      %s150 = sphi 0, %s148
      %s151 = sphi 0, %s150
      %s165 = sphi 0, %s151
      %s173 = sphi 0, %s175
      %s176 = sphi 0, %s173
      %s177 = sphi 0, %s176
      %s193 = sphi 0, %s177
    $region4: #{tpu_custom_call.1} parent=1 // loop_header_branch
      %19 = sbr.rel (%p17) target = $region8
    $region5: #{tpu_custom_call.1} parent=1 // loop_body
      %s21 = ssub.s32 %s16, 1
      %s22 = ssub.s32 %s16, 2
      %s29 = sadd.s32 1, %s24
      %p30 = scmp.ge.s32.totalorder %s29, 1
      %s31 = scalar_select %p30, 0, %s29
      %s32 = sadd.s32 1, %s23
      %s33 = scalar_select %p30, %s32, %s23
      %p34 = scmp.ge.s32.totalorder %s33, 2
      %s35 = scalar_select %p34, 0, %s33
      %s36 = ssub.s32 %s23, %s35
      %s37 = ssub.s32 %s24, %s31
      %s38 = sor.u32 %s36, %s37
      %p39 = scmp.eq.s32.totalorder %s38, 0
      %s41 = sadd.s32 %s40, 1
      %s42 = scalar_select %p39, %s40, %s41
      %p45 = pneg %p39
      %p46 = scmp.eq.s32.totalorder %s16, 1
      %p47 = por %p45, %p46
      %p48 = scmp.ne.s32.totalorder %s40, %s43
      %p49 = scmp.eq.s32.totalorder %s16, 0
      %p50 = por %p48, %p49
      %p51 = scmp.ne.s32.totalorder %s40, %s43
      %p52 = scmp.eq.s32.totalorder %s21, 1
      %p53 = por %p51, %p52
      %p54 = scmp.ne.s32.totalorder %s43, %s44
      %p55 = scmp.eq.s32.totalorder %s21, 0
      %p56 = por %p54, %p55
      %p57 = scmp.ne.s32.totalorder %s43, %s44
      %p58 = scmp.eq.s32.totalorder %s22, 1
      %p59 = por %p57, %p58
      %p61 = scmp.ne.s32.totalorder %s44, %s60
      %p62 = scmp.eq.s32.totalorder %s22, 0
      %p63 = por %p61, %p62
      %s65 = sadd.s32 %s64, 1
      %p68 = scmp.eq.s32.totalorder %s16, 1
      %p69 = scmp.ne.s32.totalorder %s64, %s66
      %p70 = scmp.eq.s32.totalorder %s16, 0
      %p71 = por %p69, %p70
      %p72 = scmp.ne.s32.totalorder %s64, %s66
      %p73 = scmp.eq.s32.totalorder %s21, 1
      %p74 = por %p72, %p73
      %p75 = scmp.ne.s32.totalorder %s66, %s67
      %p76 = scmp.eq.s32.totalorder %s21, 0
      %p77 = por %p75, %p76
      %p78 = scmp.ne.s32.totalorder %s66, %s67
      %p79 = scmp.eq.s32.totalorder %s22, 1
      %p80 = por %p78, %p79
      %p82 = scmp.ne.s32.totalorder %s67, %s81
      %p83 = scmp.eq.s32.totalorder %s22, 0
      %p84 = por %p82, %p83
      %s86 = sadd.s32 %s85, 1
      %p89 = scmp.eq.s32.totalorder %s16, 1
      %p90 = scmp.ne.s32.totalorder %s85, %s87
      %p91 = scmp.eq.s32.totalorder %s16, 0
      %p92 = por %p90, %p91
      %p93 = scmp.ne.s32.totalorder %s85, %s87
      %p94 = scmp.eq.s32.totalorder %s21, 1
      %p95 = por %p93, %p94
      %p96 = scmp.ne.s32.totalorder %s87, %s88
      %p97 = scmp.eq.s32.totalorder %s21, 0
      %p98 = por %p96, %p97
      %p99 = scmp.ne.s32.totalorder %s87, %s88
      %p100 = scmp.eq.s32.totalorder %s22, 1
      %p101 = por %p99, %p100
      %p103 = scmp.ne.s32.totalorder %s88, %s102
      %p104 = scmp.eq.s32.totalorder %s22, 0
      %p105 = por %p103, %p104
      %s107 = sadd.s32 %s106, 1
      %p110 = scmp.eq.s32.totalorder %s16, 1
      %p111 = scmp.ne.s32.totalorder %s106, %s108
      %p112 = scmp.eq.s32.totalorder %s16, 0
      %p113 = por %p111, %p112
      %p114 = scmp.ne.s32.totalorder %s106, %s108
      %p115 = scmp.eq.s32.totalorder %s21, 1
      %p116 = por %p114, %p115
      %p117 = scmp.ne.s32.totalorder %s108, %s109
      %p118 = scmp.eq.s32.totalorder %s21, 0
      %p119 = por %p117, %p118
      %p120 = scmp.ne.s32.totalorder %s108, %s109
      %p121 = scmp.eq.s32.totalorder %s22, 1
      %p122 = por %p120, %p121
      %p124 = scmp.ne.s32.totalorder %s109, %s123
      %p125 = scmp.eq.s32.totalorder %s22, 0
      %p126 = por %p124, %p125
      %s128 = sadd.s32 %s127, 1
      %p131 = scmp.eq.s32.totalorder %s16, 1
      %p132 = scmp.ne.s32.totalorder %s127, %s129
      %p133 = scmp.eq.s32.totalorder %s16, 0
      %p134 = por %p132, %p133
      %p135 = scmp.ne.s32.totalorder %s127, %s129
      %p136 = scmp.eq.s32.totalorder %s21, 1
      %p137 = por %p135, %p136
      %p138 = scmp.ne.s32.totalorder %s129, %s130
      %p139 = scmp.eq.s32.totalorder %s21, 0
      %p140 = por %p138, %p139
      %p141 = scmp.ne.s32.totalorder %s129, %s130
      %p142 = scmp.eq.s32.totalorder %s22, 1
      %p143 = por %p141, %p142
      %p145 = scmp.ne.s32.totalorder %s130, %s144
      %p146 = scmp.eq.s32.totalorder %s22, 0
      %p147 = por %p145, %p146
      %s149 = sadd.s32 %s148, 1
      %p152 = scmp.eq.s32.totalorder %s16, 1
      %p153 = scmp.ne.s32.totalorder %s148, %s150
      %p154 = scmp.eq.s32.totalorder %s16, 0
      %p155 = por %p153, %p154
      %p156 = scmp.ne.s32.totalorder %s148, %s150
      %p157 = scmp.eq.s32.totalorder %s21, 1
      %p158 = por %p156, %p157
      %p159 = scmp.ne.s32.totalorder %s150, %s151
      %p160 = scmp.eq.s32.totalorder %s21, 0
      %p161 = por %p159, %p160
      %p162 = scmp.ne.s32.totalorder %s150, %s151
      %p163 = scmp.eq.s32.totalorder %s22, 1
      %p164 = por %p162, %p163
      %p166 = scmp.ne.s32.totalorder %s151, %s165
      %p167 = scmp.eq.s32.totalorder %s22, 0
      %p168 = por %p166, %p167
      %s169 = ssub.s32 %s23, %s35
      %s170 = ssub.s32 %s24, %s31
      %s171 = sor.u32 %s169, %s170
      %p172 = scmp.eq.s32.totalorder %s171, 0
      %s174 = sadd.s32 %s173, 1
      %s175 = scalar_select %p172, %s173, %s174
      %p178 = pneg %p172
      %p179 = scmp.eq.s32.totalorder %s16, 1
      %p180 = por %p178, %p179
      %p181 = scmp.ne.s32.totalorder %s173, %s176
      %p182 = scmp.eq.s32.totalorder %s16, 0
      %p183 = por %p181, %p182
      %p184 = scmp.ne.s32.totalorder %s173, %s176
      %p185 = scmp.eq.s32.totalorder %s21, 1
      %p186 = por %p184, %p185
      %p187 = scmp.ne.s32.totalorder %s176, %s177
      %p188 = scmp.eq.s32.totalorder %s21, 0
      %p189 = por %p187, %p188
      %p190 = scmp.ne.s32.totalorder %s176, %s177
      %p191 = scmp.eq.s32.totalorder %s22, 1
      %p192 = por %p190, %p191
      %p194 = scmp.ne.s32.totalorder %s177, %s193
      %p195 = scmp.eq.s32.totalorder %s22, 0
      %p196 = por %p194, %p195
      %p197 = scmp.le.s32.totalorder 1, %s16
      %p198 = scmp.lt.s32.totalorder %s16, 3
      %p199 = pnand %p197, %p198
      %p200 = pneg %p199
      // Predicated region
      $region9: #{tpu_custom_call.1} parent=5 // pred_check
        _
      $region10: #{tpu_custom_call.1} parent=5 // pred_check_branch
        %202 = sbr.rel (%p199) target = $region12
      $region11: #{tpu_custom_call.1} parent=5 // pred_region
        %s203 = ssub.s32 %s16, 1
        // Predicated region
        $region13: #{tpu_custom_call.1} parent=11 // pred_check
          %p204 = pneg %p77
        $region14: #{tpu_custom_call.1} parent=11 // pred_check_branch
          %206 = sbr.rel (%p204) target = $region16
        $region15: #{tpu_custom_call.1} parent=11 // pred_region
          _
        $region16: #{tpu_custom_call.1} parent=11 // pred_fallthru
          _
        // Predicated region
        $region17: #{tpu_custom_call.1} parent=11 // pred_check
          %p207 = pneg %p98
        $region18: #{tpu_custom_call.1} parent=11 // pred_check_branch
          %209 = sbr.rel (%p207) target = $region20
        $region19: #{tpu_custom_call.1} parent=11 // pred_region
          _
        $region20: #{tpu_custom_call.1} parent=11 // pred_fallthru
          _
        // Predicated region
        $region21: #{tpu_custom_call.1} parent=11 // pred_check
          %p210 = pneg %p119
        $region22: #{tpu_custom_call.1} parent=11 // pred_check_branch
          %212 = sbr.rel (%p210) target = $region24
        $region23: #{tpu_custom_call.1} parent=11 // pred_region
          _
        $region24: #{tpu_custom_call.1} parent=11 // pred_fallthru
          _
        // Predicated region
        $region25: #{tpu_custom_call.1} parent=11 // pred_check
          %p213 = pneg %p140
        $region26: #{tpu_custom_call.1} parent=11 // pred_check_branch
          %215 = sbr.rel (%p213) target = $region28
        $region27: #{tpu_custom_call.1} parent=11 // pred_region
          _
        $region28: #{tpu_custom_call.1} parent=11 // pred_fallthru
          _
        // Predicated region
        $region29: #{tpu_custom_call.1} parent=11 // pred_check
          %p216 = pneg %p161
        $region30: #{tpu_custom_call.1} parent=11 // pred_check_branch
          %218 = sbr.rel (%p216) target = $region32
        $region31: #{tpu_custom_call.1} parent=11 // pred_region
          %s220 = ssub.s32 16, 16
          %221 = vsyncadd [#allocation5], %s220
          %s223 = sshll.u32 %s5, 4
          %s224 = int_to_ptr.vmem [resolvable:$true] %s223
          %226 = dma.vmem_to_smem %s224, 16, [#allocation3], [#allocation5]
        $region32: #{tpu_custom_call.1} parent=11 // pred_fallthru
          _
      $region12: #{tpu_custom_call.1} parent=5 // pred_fallthru
        _
      %p227 = scmp.lt.s32.totalorder %s16, 2
      // Predicated region
      $region33: #{tpu_custom_call.1} parent=5 // pred_check
        %p228 = pneg %p227
      $region34: #{tpu_custom_call.1} parent=5 // pred_check_branch
        %230 = sbr.rel (%p228) target = $region36
      $region35: #{tpu_custom_call.1} parent=5 // pred_region
        // Predicated region
        $region37: #{tpu_custom_call.1} parent=35 // pred_check
          %p231 = pneg %p50
        $region38: #{tpu_custom_call.1} parent=35 // pred_check_branch
          %233 = sbr.rel (%p231) target = $region40
        $region39: #{tpu_custom_call.1} parent=35 // pred_region
          %s234 = smul.u32 6, %s24
          %p235 = scmp.lt.s32.totalorder %s23, 1
          %s236 = scalar_select %p235, %s23, 1
          %p237 = scmp.lt.s32.totalorder %s234, 5
          %s238 = scalar_select %p237, %s234, 5
          %s239 = smul.addr %s236, 6
          %s240 = sadd.s32 %s238, %s239
          %s241 = smul.addr %s240, 4
          %s242 = scalar_lea.vmem %s0, %s241
          %s243 = smul.u32 6, %s24
        $region40: #{tpu_custom_call.1} parent=35 // pred_fallthru
          _
      $region36: #{tpu_custom_call.1} parent=5 // pred_fallthru
        _
      %p244 = scmp.le.s32.totalorder 1, %s16
      %p245 = scmp.lt.s32.totalorder %s16, 3
      %p246 = pnand %p244, %p245
      %p247 = pneg %p246
      // Predicated region
      $region41: #{tpu_custom_call.1} parent=5 // pred_check
        _
      $region42: #{tpu_custom_call.1} parent=5 // pred_check_branch
        %249 = sbr.rel (%p246) target = $region44
      $region43: #{tpu_custom_call.1} parent=5 // pred_region
        %s250 = ssub.s32 %s16, 1
        // Predicated region
        $region45: #{tpu_custom_call.1} parent=43 // pred_check
          %p251 = pneg %p161
        $region46: #{tpu_custom_call.1} parent=43 // pred_check_branch
          %253 = sbr.rel (%p251) target = $region48
        $region47: #{tpu_custom_call.1} parent=43 // pred_region
          %254 = dma.done [#allocation5], 16
        $region48: #{tpu_custom_call.1} parent=43 // pred_fallthru
          _
        %255 = sfence
        %s256 = smul.u32 6, %s26
        %p257 = scmp.lt.s32.totalorder %s25, 1
        %s258 = scalar_select %p257, %s25, 1
        %p259 = scmp.lt.s32.totalorder %s256, 5
        %s260 = scalar_select %p259, %s256, 5
        %s261 = smul.addr %s258, 6
        %s262 = sadd.s32 %s260, %s261
        %s263 = smul.addr %s262, 4
        %s264 = scalar_lea.vmem %s0, %s263
        %p265 = pneg %p56
        %p266 = pneg %p53
        %p267 = pneg %p77
        %p268 = pneg %p74
        %p269 = pneg %p98
        %p270 = pneg %p95
        %p271 = pneg %p119
        %p272 = pneg %p116
        %p273 = pneg %p140
        %p274 = pneg %p137
        %p275 = pneg %p161
        %p276 = pneg %p158
        %p277 = pneg %p189
        %p278 = pneg %p186
        %s279 = sand.u32 %s176, 1
        %s280 = scalar_lea.sflag [#allocation4], %s279
        %s281 = sand.u32 %s176, 1
        %s282 = smul.addr %s281, 16
        %s283 = scalar_lea.vmem [#allocation6], %s282
        %s284 = smul.u32 6, %s26
        %p285 = scmp.lt.s32.totalorder %s25, 1
        %s286 = scalar_select %p285, %s25, 1
        %p287 = scmp.lt.s32.totalorder %s284, 5
        %s288 = scalar_select %p287, %s284, 5
        %s289 = smul.addr %s286, 6
        %s290 = sadd.s32 %s288, %s289
        %s291 = smul.addr %s290, 4
        %s292 = scalar_lea.vmem %s0, %s291
        %s293 = smul.u32 6, %s26
        %s294 = smul.u32 2, %s26
        %s296 = sld [smem:[#allocation3]]
        %s297 = sld [smem:[#allocation3 + $0x1]]
        %v298 = vld [vmem:[%s292] sm:$0xf]
        %v299 = vld [vmem:[%s292 + $0x4] sm:$0xf]
        %v300 = vld [vmem:[%s292 + $0x8] sm:$0xf]
        %v301 = vld [vmem:[%s292 + $0xc] sm:$0xf]
        %v302 = vld [vmem:[%s292 + $0x10] sm:$0xf]
        %v303 = vld [vmem:[%s292 + $0x14] sm:$0xf]
        %v304 = vld [vmem:[%s1] sm:$0xf]
        %v305 = vld [vmem:[%s1 + $0x4] sm:$0xf]
        %v312 = vunpack.c.l.b16 %v298
        %v313 = vunpack.c.l.b16 %v299
        %v314 = vunpack.c.l.b16 %v300
        %v315 = vunpack.c.l.b16 %v301
        %v316 = vunpack.c.l.b16 %v302
        %v317 = vunpack.c.l.b16 %v303
        %v318 = vpack.c.b16 %v313, %v312
        %v319 = vpack.c.b16 %v315, %v314
        %v320 = vpack.c.b16 %v317, %v316
        %v323 = vunpack.c.l.b16 %v304
        %v324 = vunpack.c.l.b16 %v305
        %v325 = vpack.c.b16 %v324, %v323
        %vm327 = vcmask 130048
        %v329 = vsel %vm327, %v318, 0
        %v332 = vsel %vm327, %v319, 0
        %v335 = vsel %vm327, %v320, 0
        %337 = vmatprep.subr.bf16.mxu0 0
        %338 = vmatpush1.bf16.msra.mxu0 %v325
        %339 = vmatprep.subr.bf16.mxu0 0
        %340 = vmatpush1.bf16.msra.mxu0 0
        %341 = vmatprep.subr.bf16.mxu0 0
        %342 = vmatpush1.bf16.msra.mxu0 0
        %343 = vmatprep.subr.bf16.mxu0 0
        %344 = vmatpush1.bf16.msra.mxu0 0
        %345 = vmatprep.subr.bf16.mxu0 0
        %346 = vmatpush1.bf16.msra.mxu0 0
        %347 = vmatprep.subr.bf16.mxu0 0
        %348 = vmatpush1.bf16.msra.mxu0 0
        %349 = vmatprep.subr.bf16.mxu0 0
        %350 = vmatpush1.bf16.msra.mxu0 0
        %351 = vmatprep.subr.bf16.mxu0 0
        %352 = vmatpush1.bf16.msra.mxu0 0
        %353 = vmatprep.subr.bf16.mxu0 0
        %354 = vmatpush1.bf16.msra.mxu0 0
        %355 = vmatprep.subr.bf16.mxu0 0
        %356 = vmatpush1.bf16.msra.mxu0 0
        %357 = vmatprep.subr.bf16.mxu0 0
        %358 = vmatpush1.bf16.msra.mxu0 0
        %359 = vmatprep.subr.bf16.mxu0 0
        %360 = vmatpush1.bf16.msra.mxu0 0
        %361 = vmatprep.subr.bf16.mxu0 0
        %362 = vmatpush1.bf16.msra.mxu0 0
        %363 = vmatprep.subr.bf16.mxu0 0
        %364 = vmatpush1.bf16.msra.mxu0 0
        %365 = vmatprep.subr.bf16.mxu0 0
        %366 = vmatpush1.bf16.msra.mxu0 0
        %367 = vmatprep.subr.bf16.mxu0 0
        %368 = vmatpush1.bf16.msra.mxu0 0
        %369 = vmatprep.mubr.bf16.mxu0 0
        %370 = vmatmul.mubr.bf16.gmra.mrb[0].mxu0 %v329
        %v371 = vpop.f32.mrb[0].mxu0
        %v372 = vadd.f32 0.0, %v371
        %v373 = vpop.f32.mrb[0].mxu0
        %v374 = vpop.f32.mrb[0].mxu0
        %v375 = vadd.f32 0.0, %v374
        %v376 = vpop.f32.mrb[0].mxu0
        %377 = vmatprep.mubr.bf16.mxu0 0
        %378 = vmatmul.mubr.bf16.gmra.mrb[0].mxu0 %v332
        %v379 = vpop.f32.mrb[0].mxu0
        %v380 = vadd.f32 0.0, %v379
        %v381 = vpop.f32.mrb[0].mxu0
        %v382 = vpop.f32.mrb[0].mxu0
        %v383 = vadd.f32 0.0, %v382
        %v384 = vpop.f32.mrb[0].mxu0
        %385 = vmatprep.mubr.bf16.mxu0 0
        %386 = vmatmul.mubr.bf16.gmra.mrb[0].mxu0 %v335
        %v387 = vpop.f32.mrb[0].mxu0
        %v388 = vadd.f32 0.0, %v387
        %v389 = vpop.f32.mrb[0].mxu0
        %v390 = vpop.f32.mrb[0].mxu0
        %v391 = vadd.f32 0.0, %v390
        %v392 = vpop.f32.mrb[0].mxu0
        %393 = vdwg.mxu0
        %v394 = vld [vmem:[%s2] sm:$0x1]
        %v396 = vlaneseq
        %v397 = vshrl.u32 %v396, 7
        %v398 = vsub.s32 0, %v397
        %v399 = vrot.slane %v394, %v398
        %v401 = vadd.f32 %v372, %v399
        %v402 = vadd.f32 %v375, %v399
        %v403 = vadd.f32 %v380, %v399
        %v404 = vadd.f32 %v383, %v399
        %v405 = vadd.f32 %v388, %v399
        %v406 = vadd.f32 %v391, %v399
        %vm407 = vcmp.ge.f32.partialorder %v401, 0.0
        %vm408 = vcmp.ge.f32.partialorder %v402, 0.0
        %vm409 = vcmp.ge.f32.partialorder %v403, 0.0
        %vm410 = vcmp.ge.f32.partialorder %v404, 0.0
        %vm411 = vcmp.ge.f32.partialorder %v405, 0.0
        %vm412 = vcmp.ge.f32.partialorder %v406, 0.0
        %v413 = vstv %s296
        %v414 = vmul.f32 %v413, %v401
        %v415 = vmul.f32 %v413, %v402
        %v416 = vmul.f32 %v413, %v403
        %v417 = vmul.f32 %v413, %v404
        %v418 = vmul.f32 %v413, %v405
        %v419 = vmul.f32 %v413, %v406
        %v420 = vsel %vm407, %v401, %v414
        %v421 = vsel %vm408, %v402, %v415
        %v422 = vsel %vm409, %v403, %v416
        %v423 = vsel %vm410, %v404, %v417
        %v424 = vsel %vm411, %v405, %v418
        %v425 = vsel %vm412, %v406, %v419
        %v426 = vpack.c.bf16 %v421, %v420
        %v427 = vpack.c.bf16 %v423, %v422
        %v428 = vpack.c.bf16 %v425, %v424
        %v429 = vld [vmem:[%s3] sm:$0xf]
        %v430 = vld [vmem:[%s3 + $0x4] sm:$0xf]
        %v431 = vld [vmem:[%s3 + $0x8] sm:$0xf]
        %v432 = vld [vmem:[%s3 + $0xc] sm:$0xf]
        %v433 = vld [vmem:[%s4] sm:$0x1]
        %v435 = vlaneseq
        %v436 = vshrl.u32 %v435, 7
        %v437 = vsub.s32 0, %v436
        %v438 = vrot.slane %v433, %v437
        %v444 = vunpack.c.l.b16 %v429
        %v445 = vunpack.c.l.b16 %v430
        %v446 = vunpack.c.l.b16 %v431
        %v447 = vunpack.c.l.b16 %v432
        %v448 = vpack.c.b16 %v445, %v444
        %v449 = vpack.c.b16 %v447, %v446
        %vm452 = vcmask 261120
        %v454 = vsel %vm452, %v426, 0
        %v457 = vsel %vm452, %v427, 0
        %v460 = vsel %vm452, %v428, 0
        %462 = vmatprep.subr.bf16.mxu0 0
        %463 = vmatpush1.bf16.msra.mxu0 %v448
        %464 = vmatprep.subr.bf16.mxu0 0
        %465 = vmatpush1.bf16.msra.mxu0 %v449
        %466 = vmatprep.subr.bf16.mxu0 0
        %467 = vmatpush1.bf16.msra.mxu0 0
        %468 = vmatprep.subr.bf16.mxu0 0
        %469 = vmatpush1.bf16.msra.mxu0 0
        %470 = vmatprep.subr.bf16.mxu0 0
        %471 = vmatpush1.bf16.msra.mxu0 0
        %472 = vmatprep.subr.bf16.mxu0 0
        %473 = vmatpush1.bf16.msra.mxu0 0
        %474 = vmatprep.subr.bf16.mxu0 0
        %475 = vmatpush1.bf16.msra.mxu0 0
        %476 = vmatprep.subr.bf16.mxu0 0
        %477 = vmatpush1.bf16.msra.mxu0 0
        %478 = vmatprep.subr.bf16.mxu0 0
        %479 = vmatpush1.bf16.msra.mxu0 0
        %480 = vmatprep.subr.bf16.mxu0 0
        %481 = vmatpush1.bf16.msra.mxu0 0
        %482 = vmatprep.subr.bf16.mxu0 0
        %483 = vmatpush1.bf16.msra.mxu0 0
        %484 = vmatprep.subr.bf16.mxu0 0
        %485 = vmatpush1.bf16.msra.mxu0 0
        %486 = vmatprep.subr.bf16.mxu0 0
        %487 = vmatpush1.bf16.msra.mxu0 0
        %488 = vmatprep.subr.bf16.mxu0 0
        %489 = vmatpush1.bf16.msra.mxu0 0
        %490 = vmatprep.subr.bf16.mxu0 0
        %491 = vmatpush1.bf16.msra.mxu0 0
        %492 = vmatprep.subr.bf16.mxu0 0
        %493 = vmatpush1.bf16.msra.mxu0 0
        %494 = vmatprep.mubr.bf16.mxu0 0
        %495 = vmatmul.mubr.bf16.gmra.mrb[0].mxu0 %v454
        %v496 = vpop.f32.mrb[0].mxu0
        %v497 = vadd.f32 %v438, %v496
        %v498 = vpop.f32.mrb[0].mxu0
        %v499 = vpop.f32.mrb[0].mxu0
        %v500 = vadd.f32 %v438, %v499
        %v501 = vpop.f32.mrb[0].mxu0
        %502 = vmatprep.mubr.bf16.mxu0 0
        %503 = vmatmul.mubr.bf16.gmra.mrb[0].mxu0 %v457
        %v504 = vpop.f32.mrb[0].mxu0
        %v505 = vadd.f32 %v438, %v504
        %v506 = vpop.f32.mrb[0].mxu0
        %v507 = vpop.f32.mrb[0].mxu0
        %v508 = vadd.f32 %v438, %v507
        %v509 = vpop.f32.mrb[0].mxu0
        %510 = vmatprep.mubr.bf16.mxu0 0
        %511 = vmatmul.mubr.bf16.gmra.mrb[0].mxu0 %v460
        %v512 = vpop.f32.mrb[0].mxu0
        %v513 = vadd.f32 %v438, %v512
        %v514 = vpop.f32.mrb[0].mxu0
        %v515 = vpop.f32.mrb[0].mxu0
        %v516 = vadd.f32 %v438, %v515
        %v517 = vpop.f32.mrb[0].mxu0
        %518 = vdwg.mxu0
        %525 = vrot.lane.b32.xlu0 %v372, 96
        %v526 = vpop.permute.xlu0 %525
        %527 = vrot.lane.b32.xlu0 %v375, 96
        %v528 = vpop.permute.xlu0 %527
        %529 = vrot.lane.b32.xlu0 %v380, 96
        %v530 = vpop.permute.xlu0 %529
        %531 = vrot.lane.b32.xlu0 %v383, 96
        %v532 = vpop.permute.xlu0 %531
        %533 = vrot.lane.b32.xlu0 %v388, 96
        %v534 = vpop.permute.xlu0 %533
        %535 = vrot.lane.b32.xlu0 %v391, 96
        %v536 = vpop.permute.xlu0 %535
        %v543 = vadd.f32 %v497, %v526
        %v544 = vadd.f32 %v500, %v528
        %v545 = vadd.f32 %v505, %v530
        %v546 = vadd.f32 %v508, %v532
        %v547 = vadd.f32 %v513, %v534
        %v548 = vadd.f32 %v516, %v536
        %vm549 = vcmp.ge.f32.partialorder %v543, 0.0
        %vm550 = vcmp.ge.f32.partialorder %v544, 0.0
        %vm551 = vcmp.ge.f32.partialorder %v545, 0.0
        %vm552 = vcmp.ge.f32.partialorder %v546, 0.0
        %vm553 = vcmp.ge.f32.partialorder %v547, 0.0
        %vm554 = vcmp.ge.f32.partialorder %v548, 0.0
        %v555 = vstv %s297
        %v556 = vmul.f32 %v555, %v543
        %v557 = vmul.f32 %v555, %v544
        %v558 = vmul.f32 %v555, %v545
        %v559 = vmul.f32 %v555, %v546
        %v560 = vmul.f32 %v555, %v547
        %v561 = vmul.f32 %v555, %v548
        %v562 = vsel %vm549, %v543, %v556
        %v563 = vsel %vm550, %v544, %v557
        %v564 = vsel %vm551, %v545, %v558
        %v565 = vsel %vm552, %v546, %v559
        %v566 = vsel %vm553, %v547, %v560
        %v567 = vsel %vm554, %v548, %v561
        %568 = vst.msk [vmem:[#allocation2] sm:$0xff] %vm452, %v562
        %569 = vst.msk [vmem:[#allocation2 + $0x8] sm:$0xff] %vm452, %v563
        %570 = vst.msk [vmem:[#allocation2 + $0x10] sm:$0xff] %vm452, %v564
        %571 = vst.msk [vmem:[#allocation2 + $0x18] sm:$0xff] %vm452, %v565
        %572 = vst.msk [vmem:[#allocation2 + $0x20] sm:$0xff] %vm452, %v566
        %573 = vst.msk [vmem:[#allocation2 + $0x28] sm:$0xff] %vm452, %v567
        %v574 = vld [vmem:[#allocation2] ss:$3 sm:$0xff]
        %s575 = scalar_lea.vmem [#allocation2], 24
        %v576 = vld [vmem:[%s575] ss:$3 sm:$0xff]
        %s577 = scalar_lea.vmem [#allocation2], 1
        %v578 = vld [vmem:[%s577] ss:$3 sm:$0xff]
        %s579 = scalar_lea.vmem [#allocation2], 25
        %v580 = vld [vmem:[%s579] ss:$3 sm:$0xff]
        %v581 = vmax.f32 %v574, %v578
        %v582 = vmax.f32 %v576, %v580
        %s583 = scalar_lea.vmem [#allocation2], 2
        %v584 = vld [vmem:[%s583] ss:$3 sm:$0xff]
        %s585 = scalar_lea.vmem [#allocation2], 26
        %v586 = vld [vmem:[%s585] ss:$3 sm:$0xff]
        %v587 = vmax.f32 %v581, %v584
        %v588 = vmax.f32 %v582, %v586
        %589 = vst.msk [vmem:[%s283] sm:$0xff] %vm452, %v587
        %590 = vst.msk [vmem:[%s283 + $0x8] sm:$0xff] %vm452, %v588
        %s591 = sand.u32 %s176, 1
        %s592 = scalar_lea.sflag [#allocation4], %s591
        %s593 = sand.u32 %s176, 1
        %s594 = smul.addr %s593, 16
        %s595 = scalar_lea.vmem [#allocation6], %s594
        // Predicated region
        $region49: #{tpu_custom_call.1} parent=43 // pred_check
          %p596 = pneg %p186
        $region50: #{tpu_custom_call.1} parent=43 // pred_check_branch
          %598 = sbr.rel (%p596) target = $region52
        $region51: #{tpu_custom_call.1} parent=43 // pred_region
          %s599 = smul.u32 2, %s26
          %s601 = ssub.s32 256, 256
          %602 = vsyncadd %s592, %s601
          %s603 = smul.addr %s25, 2
          %s604 = sadd.s32 %s599, %s603
          %s605 = smul.addr %s604, 128
          %s606 = scalar_lea.hbm %s6, %s605
          %s607 = sshll.u32 %s595, 4
          %s608 = int_to_ptr.vmem [resolvable:$true] %s607
          %613 = dma.vmem_to_hbm [thread:$0]  %s608, 256, %s606, %s592, 128, 128, 8
        $region52: #{tpu_custom_call.1} parent=43 // pred_fallthru
          _
      $region44: #{tpu_custom_call.1} parent=5 // pred_fallthru
        _
      %p614 = scmp.le.s32.totalorder 2, %s16
      // Predicated region
      $region53: #{tpu_custom_call.1} parent=5 // pred_check
        %p615 = pneg %p614
      $region54: #{tpu_custom_call.1} parent=5 // pred_check_branch
        %617 = sbr.rel (%p615) target = $region56
      $region55: #{tpu_custom_call.1} parent=5 // pred_region
        %s618 = ssub.s32 %s16, 2
        // Predicated region
        $region57: #{tpu_custom_call.1} parent=55 // pred_check
          %p619 = pneg %p192
        $region58: #{tpu_custom_call.1} parent=55 // pred_check_branch
          %621 = sbr.rel (%p619) target = $region60
        $region59: #{tpu_custom_call.1} parent=55 // pred_region
          %s622 = sand.u32 %s177, 1
          %s623 = scalar_lea.sflag [#allocation4], %s622
          %s624 = sand.u32 %s177, 1
          %s625 = smul.addr %s624, 16
          %s626 = scalar_lea.vmem [#allocation6], %s625
          %627 = dma.done %s623, 256
        $region60: #{tpu_custom_call.1} parent=55 // pred_fallthru
          _
      $region56: #{tpu_custom_call.1} parent=5 // pred_fallthru
        _
    $region6: #{tpu_custom_call.1} parent=1 // loop_footer
      %s20 = sadd.s32 1, %s16
    $region7: #{tpu_custom_call.1} parent=1 // loop_footer_branch
      %15 = sbr.rel target = $region3
    $region8: #{tpu_custom_call.1} parent=1 // loop_exit
      _
    %628 = vsyncpa [#allocation4], 1
    %s629 = scalar_lea.sflag [#allocation4], 1
    %630 = vsyncpa %s629, 1
    %631 = vsyncpa [#allocation5], 1
    %s632 = scalar_lea.sflag [#allocation5], 1
    %633 = vsyncpa %s632, 1

</llo_original>
